<compile_context>
chip_gen: v6e
topology: v6e:2x2x1
jax: 0.10.0
libtpu: 0.0.40
codegen_flags: <defaults>
</compile_context>

<pallas_src>
import functools

import numpy as np
import jax
import jax.numpy as jnp
from jax.experimental import pallas as pl
from jax.experimental.pallas import tpu as pltpu


# ----------------------------------------------------------------------------
# small helpers
# ----------------------------------------------------------------------------
def _round_up(a, b):
    return -(-a // b) * b


def _cdiv(a, b):
    return -(-a // b)


# ----------------------------------------------------------------------------
# Deterministic parameter setup (hann window, DFT basis, librosa-style melmat)
# ----------------------------------------------------------------------------
def _hz_to_mel_slaney(f):
    f = np.asarray(f, dtype=np.float64)
    f_sp = 200.0 / 3.0
    mels = f / f_sp
    min_log_hz = 1000.0
    min_log_mel = min_log_hz / f_sp
    logstep = np.log(6.4) / 27.0
    log_region = f >= min_log_hz
    mels = np.where(log_region,
                    min_log_mel + np.log(np.maximum(f, min_log_hz) / min_log_hz) / logstep,
                    mels)
    return mels


def _mel_to_hz_slaney(m):
    m = np.asarray(m, dtype=np.float64)
    f_sp = 200.0 / 3.0
    freqs = f_sp * m
    min_log_hz = 1000.0
    min_log_mel = min_log_hz / f_sp
    logstep = np.log(6.4) / 27.0
    log_region = m >= min_log_mel
    freqs = np.where(log_region,
                     min_log_hz * np.exp(logstep * (m - min_log_mel)),
                     freqs)
    return freqs


def make_mel_filterbank(sr, n_fft, n_mels, fmin, fmax):
    """librosa.filters.mel (slaney mel scale, slaney norm), returns (n_mels, n_freq)."""
    n_freq = 1 + n_fft // 2
    fftfreqs = np.linspace(0.0, sr / 2.0, n_freq)
    mel_min = _hz_to_mel_slaney(fmin)
    mel_max = _hz_to_mel_slaney(fmax)
    mel_pts = np.linspace(mel_min, mel_max, n_mels + 2)
    mel_f = _mel_to_hz_slaney(mel_pts)

    fdiff = np.diff(mel_f)
    ramps = mel_f[:, None] - fftfreqs[None, :]
    lower = -ramps[:-2] / fdiff[:-1, None]
    upper = ramps[2:] / fdiff[1:, None]
    weights = np.maximum(0.0, np.minimum(lower, upper))

    enorm = 2.0 / (mel_f[2:n_mels + 2] - mel_f[:n_mels])     # slaney norm
    weights = weights * enorm[:, None]
    return weights.astype(np.float32)


def make_windowed_dft(win_length, n_fft):
    """Hann(periodic) window folded into the onesided real/imag DFT bases."""
    assert win_length == n_fft, "win_length == fft_size assumed (module default)"
    # TODO(synk): support win_length < fft_size (centered zero-padded window).
    n = np.arange(win_length, dtype=np.float64)
    window = 0.5 - 0.5 * np.cos(2.0 * np.pi * n / win_length)   # torch.hann_window (periodic)
    n_freq = 1 + n_fft // 2
    k = np.arange(n_freq, dtype=np.float64)
    phase = 2.0 * np.pi * np.outer(n, k) / n_fft                # (win, n_freq)
    cos_b = (window[:, None] * np.cos(phase)).astype(np.float32)
    sin_b = (window[:, None] * (-np.sin(phase))).astype(np.float32)
    return cos_b, sin_b


# ----------------------------------------------------------------------------
# Pallas kernel
#   chunks_ref : (1, TF, hop)      f32   hop-chunks of this frame tile
#   halo_ref   : (1, HALO, hop)    f32   next HALO chunks (frame overlap), read
#                                        from the same chunk array
#   basis_ref  : (win, 2*NF)       bf16  fused windowed cos|sin DFT basis
#   melmat_ref : (NM, NF)          bf16  mel filterbank (mels on sublanes)
#   out_ref    : (1, NM, TF)       f32   log-mel tile, frames on lanes
# ----------------------------------------------------------------------------
def _mel_kernel(chunks_ref, halo_ref, basis_ref, melmat_ref, out_ref, *,
                eps, n_shifts, nf, log_mult):
    tf = chunks_ref.shape[1]
    cur = chunks_ref[0]                                    # (TF, hop)   f32
    halo = halo_ref[0]                                     # (HALO, hop) f32
    allc = jnp.concatenate([cur, halo], axis=0)            # (TF+HALO, hop)

    # frame f = [chunk f, chunk f+1, ..., chunk f+S-1]: build the (TF, win)
    # frame matrix once in VMEM (lane concat of shifted slabs), cast once,
    # then a single deep-K MXU matmul against the fused cos|sin basis.
    frames = jnp.concatenate([allc[s:s + tf, :] for s in range(n_shifts)],
                             axis=1)                       # (TF, win) f32
    frames = frames.astype(jnp.bfloat16)

    ri = jnp.dot(frames, basis_ref[...],
                 preferred_element_type=jnp.float32)       # (TF, 2*NF) f32
    real = ri[:, :nf]
    imag = ri[:, nf:]
    power = real * real + imag * imag
    amp = jnp.sqrt(jnp.maximum(power, eps))                # (TF, NF) f32

    # frames-on-lanes epilogue: mel^T = melmat (NM, NF) @ amp^T (NF, TF)
    amp_t = amp.T.astype(jnp.bfloat16)                     # (NF, TF) bf16
    mel = jnp.dot(melmat_ref[...], amp_t,
                  preferred_element_type=jnp.float32)      # (NM, TF) f32
    mel = jnp.maximum(mel, eps)
    out_ref[0] = (jnp.log(mel) * log_mult).astype(out_ref.dtype)


# ----------------------------------------------------------------------------
# Module wrapper
# ----------------------------------------------------------------------------
class MelSpectrogramPallas:
    def __init__(self, mode, fs=16000, fft_size=256, hop_size=64, win_length=None,
                 num_mels=40, fmin=80, fmax=7600, eps=1e-10, log_base=10.0):
        assert mode in ("causal", "noncausal")
        self.mode = mode
        self.fs = fs
        self.fft_size = fft_size
        self.hop_size = hop_size
        self.win_length = fft_size if win_length is None else win_length
        assert self.win_length % self.hop_size == 0, \
            "win_length must be a multiple of hop_size for the slab decomposition"
        self.eps = float(eps)
        self.num_mels = num_mels
        self.fmin = 0 if fmin is None else fmin
        self.fmax = fs / 2 if fmax is None else fmax
        self.pad_length = self.win_length - self.hop_size

        if log_base is None:
            self.log_mult = 1.0
        elif log_base == 2.0:
            self.log_mult = 1.0 / float(np.log(2.0))
        elif log_base == 10.0:
            self.log_mult = 1.0 / float(np.log(10.0))
        else:
            raise ValueError(f"log_base: {log_base} is not supported.")

        self.n_shifts = self.win_length // self.hop_size            # = 4 here
        self.halo_chunks = max(8, _round_up(self.n_shifts - 1, 8))  # sublane aligned

        cos_b, sin_b = make_windowed_dft(self.win_length, self.fft_size)
        n_freq = cos_b.shape[1]                                     # 129
        melmat = make_mel_filterbank(fs, fft_size, num_mels, self.fmin, self.fmax)

        # Drop the Nyquist bin when the mel filterbank has exactly zero weight
        # there (fmax < fs/2): halves the DFT width, basis VMEM and mel-matmul K.
        if np.max(np.abs(melmat[:, n_freq - 1])) == 0.0:
            self.n_freq_used = n_freq - 1                           # 128 (lossless)
        else:
            self.n_freq_used = n_freq                               # keep Nyquist
        self.nf_pad = _round_up(self.n_freq_used, 128)              # 128 (or 256)
        self.nm_sub = _round_up(num_mels, 8)                        # 40 stays 40

        # fused cos|sin basis (single deep-K matmul), zero-padded to NF lanes
        basis = np.zeros((self.win_length, 2 * self.nf_pad), np.float32)
        basis[:, :self.n_freq_used] = cos_b[:, :self.n_freq_used]
        basis[:, self.nf_pad:self.nf_pad + self.n_freq_used] = sin_b[:, :self.n_freq_used]
        self.basis = jnp.asarray(basis, jnp.bfloat16)               # (win, 2*NF)

        # mel filterbank oriented (mels, freq) for the transposed mel matmul
        melmat_small = np.zeros((self.nm_sub, self.nf_pad), np.float32)
        melmat_small[:num_mels, :self.n_freq_used] = melmat[:, :self.n_freq_used]
        self.melmat_small = jnp.asarray(melmat_small, jnp.bfloat16)  # (NM, NF)

    # replicate ("edge") padding matching torch.stft / F.pad semantics
    def _pad(self, x):
        if self.mode == "causal":
            return jnp.pad(x, ((0, 0), (self.pad_length, 0)), mode="edge")
        half = self.fft_size // 2
        return jnp.pad(x, ((0, 0), (half, half)), mode="edge")

    def __call__(self, x):
        """x: (B, T) or (B, C, T) -> log-mel (B*C?, n_mels, n_frames)."""
        x = jnp.asarray(x, jnp.float32)
        if x.ndim == 3:
            x = x.reshape(-1, x.shape[2])
        B = x.shape[0]
        hop, win = self.hop_size, self.win_length

        xp = self._pad(x)
        T_pad = xp.shape[1]
        assert T_pad >= win, "input too short"
        n_frames = 1 + (T_pad - win) // hop

        HALO = self.halo_chunks
        # frame tile: as large as reasonable (deep MXU work >> grid-step
        # overhead), multiple of 128 (lane-dense output, clean amp transpose);
        # keep >= 2 total grid entries when B == 1 so both v7x cores get work.
        tf_cap = 2048
        if B == 1:
            tf_cap = min(tf_cap, max(128, _round_up(_cdiv(n_frames, 2), 128)))
        TF = max(128, min(tf_cap, _round_up(n_frames, 128)))
        n_tiles = _cdiv(n_frames, TF)
        n_frames_pad = n_tiles * TF
        n_chunks_pad = (n_tiles + 1) * TF            # covers the last tile's halo

        # chunked waveform (no frame materialization, no gather); zeros past data
        pad_samples = n_chunks_pad * hop - T_pad
        xp = jnp.pad(xp, ((0, 0), (0, pad_samples)))
        chunks = xp.reshape(B, n_chunks_pad, hop)    # (B, n_chunks_pad, hop)

        kernel = functools.partial(
            _mel_kernel, eps=self.eps, n_shifts=self.n_shifts,
            nf=self.nf_pad, log_mult=self.log_mult)

        halo_step = TF // HALO                       # block stride of the halo spec

        flops = int(2 * B * n_frames_pad
                    * (win * 2 * self.nf_pad + self.nf_pad * self.nm_sub))
        transcendentals = int(B * n_frames_pad * (self.nf_pad + self.nm_sub))
        bytes_accessed = int(4 * chunks.size
                             + 4 * B * self.nm_sub * n_frames_pad
                             + 2 * self.basis.size + 2 * self.melmat_small.size)

        mel = pl.pallas_call(
            kernel,
            out_shape=jax.ShapeDtypeStruct((B, self.nm_sub, n_frames_pad), jnp.float32),
            grid=(B, n_tiles),
            in_specs=[
                pl.BlockSpec((1, TF, hop), lambda b, t: (b, t, 0)),
                # halo = next HALO chunks of the SAME chunk array
                pl.BlockSpec((1, HALO, hop), lambda b, t: (b, (t + 1) * halo_step, 0)),
                pl.BlockSpec(self.basis.shape, lambda b, t: (0, 0)),
                pl.BlockSpec(self.melmat_small.shape, lambda b, t: (0, 0)),
            ],
            out_specs=pl.BlockSpec((1, self.nm_sub, TF), lambda b, t: (b, 0, t)),
            compiler_params=pltpu.CompilerParams(
                dimension_semantics=("parallel", "parallel"),
                vmem_limit_bytes=32 * 1024 * 1024),
            cost_estimate=pl.CostEstimate(flops=flops,
                                          transcendentals=transcendentals,
                                          bytes_accessed=bytes_accessed),
        )(chunks, chunks, self.basis, self.melmat_small)

        # strip mel/frame padding; output is already (B, n_mels, n_frames)
        return mel[:, :self.num_mels, :n_frames]


# ----------------------------------------------------------------------------
# References
#   _reference_bf16 : mirrors the kernel's bf16-MXU / f32-accumulate math
#   _reference_f32  : full-precision semantics with the complete 129-bin DFT
# ----------------------------------------------------------------------------
def _frames_and_count(mod, x):
    x = jnp.asarray(x, jnp.float32)
    if x.ndim == 3:
        x = x.reshape(-1, x.shape[2])
    xp = mod._pad(x)
    T_pad = xp.shape[1]
    n_frames = 1 + (T_pad - mod.win_length) // mod.hop_size
    idx = (jnp.arange(n_frames)[:, None] * mod.hop_size
           + jnp.arange(mod.win_length)[None, :])
    return xp[:, idx], n_frames                                   # (B, F, win)


def _reference_bf16(mod: MelSpectrogramPallas, x):
    frames, _ = _frames_and_count(mod, x)
    frames = frames.astype(jnp.bfloat16)
    ri = jnp.einsum("bfw,wk->bfk", frames, mod.basis,
                    preferred_element_type=jnp.float32)
    real = ri[..., :mod.nf_pad]
    imag = ri[..., mod.nf_pad:]
    amp = jnp.sqrt(jnp.maximum(real * real + imag * imag, mod.eps))
    mel = jnp.einsum("mk,bfk->bmf", mod.melmat_small, amp.astype(jnp.bfloat16),
                     preferred_element_type=jnp.float32)
    mel = jnp.maximum(mel, mod.eps)
    logmel = jnp.log(mel) * mod.log_mult
    return logmel[:, :mod.num_mels, :]


def _reference_f32(mod: MelSpectrogramPallas, x):
    frames, _ = _frames_and_count(mod, x)                          # f32
    cos_b, sin_b = make_windowed_dft(mod.win_length, mod.fft_size)
    hi = jax.lax.Precision.HIGHEST
    real = jnp.einsum("bfw,wk->bfk", frames, jnp.asarray(cos_b), precision=hi)
    imag = jnp.einsum("bfw,wk->bfk", frames, jnp.asarray(sin_b), precision=hi)
    amp = jnp.sqrt(jnp.maximum(real * real + imag * imag, mod.eps))
    melmat = jnp.asarray(make_mel_filterbank(mod.fs, mod.fft_size, mod.num_mels,
                                             mod.fmin, mod.fmax))
    mel = jnp.einsum("bfk,mk->bmf", amp, melmat, precision=hi)
    mel = jnp.maximum(mel, mod.eps)
    return jnp.log(mel) * mod.log_mult


if __name__ == "__main__":
    key = jax.random.PRNGKey(0)
    B, T = 2, 1024
    x = jax.random.normal(key, (B, T), dtype=jnp.float32) * 0.1

    for mode in ("causal", "noncausal"):
        mod = MelSpectrogramPallas(mode=mode, fs=16000, fft_size=256,
                                   hop_size=64, num_mels=40, fmin=80, fmax=7600)
        out = jax.block_until_ready(mod(x))
        ref_b = jax.block_until_ready(_reference_bf16(mod, x))
        ref_f = jax.block_until_ready(_reference_f32(mod, x))
        assert out.shape == ref_b.shape == ref_f.shape, (mode, out.shape, ref_b.shape)
        assert np.allclose(np.asarray(out), np.asarray(ref_b), rtol=2e-3, atol=2e-3), \
            f"Pallas output does not match bf16 JAX reference ({mode})"
        assert np.allclose(np.asarray(out), np.asarray(ref_f), rtol=5e-2, atol=5e-2), \
            f"Pallas output does not match f32 JAX reference ({mode})"

    # (B, C, T) path: module reshapes to (B*C, T)
    mod = MelSpectrogramPallas(mode="causal", fs=16000, fft_size=256,
                               hop_size=64, num_mels=40, fmin=80, fmax=7600)
    out2d = jax.block_until_ready(mod(x))
    out3d = jax.block_until_ready(mod(x.reshape(1, 2, T)))
    assert out3d.shape == out2d.shape
    assert np.allclose(np.asarray(out3d), np.asarray(out2d), rtol=1e-6, atol=1e-6)

    print("KERNEL_OK")
</pallas_src>

<mosaic_0001>
module attributes {stable_mosaic.version = 11 : i64} {
  func.func @_mel_kernel(%arg0: i32, %arg1: i32, %arg2: memref<1x128x64xf32, #tpu.memory_space<vmem>>, %arg3: memref<1x8x64xf32, #tpu.memory_space<vmem>>, %arg4: memref<256x256xbf16, #tpu.memory_space<vmem>>, %arg5: memref<40x128xbf16, #tpu.memory_space<vmem>>, %arg6: memref<1x40x128xf32, #tpu.memory_space<vmem>>) attributes {dimension_semantics = [#tpu.dimension_semantics<parallel>, #tpu.dimension_semantics<parallel>], iteration_bounds = array<i64: 2, 1>, scalar_prefetch = 0 : i64, scratch_operands = 0 : i64, tpu.core_type = #tpu.core_type<tc>, window_params = [{transform_indices = @transform_0, window_bounds = array<i64: 1, 128, 64>}, {transform_indices = @transform_1, window_bounds = array<i64: 1, 8, 64>}, {pipeline_mode = #tpu.pipeline_mode<synchronous>, transform_indices = @transform_2, window_bounds = array<i64: 256, 256>}, {pipeline_mode = #tpu.pipeline_mode<synchronous>, transform_indices = @transform_3, window_bounds = array<i64: 40, 128>}, {transform_indices = @transform_4, window_bounds = array<i64: 1, 40, 128>}]} {
    %c0 = arith.constant 0 : index
    %c0_0 = arith.constant 0 : index
    %c0_1 = arith.constant 0 : index
    %0 = vector.load %arg2[%c0, %c0_0, %c0_1] : memref<1x128x64xf32, #tpu.memory_space<vmem>>, vector<1x128x64xf32>
    %1 = vector.shape_cast %0 : vector<1x128x64xf32> to vector<128x64xf32>
    %c0_2 = arith.constant 0 : index
    %c0_3 = arith.constant 0 : index
    %c0_4 = arith.constant 0 : index
    %2 = vector.load %arg3[%c0_2, %c0_3, %c0_4] : memref<1x8x64xf32, #tpu.memory_space<vmem>>, vector<1x8x64xf32>
    %3 = vector.shape_cast %2 : vector<1x8x64xf32> to vector<8x64xf32>
    %4 = tpu.concatenate %1, %3 in 0 : vector<128x64xf32>, vector<8x64xf32> -> vector<136x64xf32>
    %5 = vector.extract_strided_slice %4 {offsets = [0, 0], sizes = [128, 64], strides = [1, 1]} : vector<136x64xf32> to vector<128x64xf32>
    %6 = vector.extract_strided_slice %4 {offsets = [1, 0], sizes = [128, 64], strides = [1, 1]} : vector<136x64xf32> to vector<128x64xf32>
    %7 = vector.extract_strided_slice %4 {offsets = [2, 0], sizes = [128, 64], strides = [1, 1]} : vector<136x64xf32> to vector<128x64xf32>
    %8 = vector.extract_strided_slice %4 {offsets = [3, 0], sizes = [128, 64], strides = [1, 1]} : vector<136x64xf32> to vector<128x64xf32>
    %9 = tpu.concatenate %5, %6, %7, %8 in 1 : vector<128x64xf32>, vector<128x64xf32>, vector<128x64xf32>, vector<128x64xf32> -> vector<128x256xf32>
    %10 = arith.truncf %9 : vector<128x256xf32> to vector<128x256xbf16>
    %c0_5 = arith.constant 0 : index
    %c0_6 = arith.constant 0 : index
    %11 = vector.load %arg4[%c0_5, %c0_6] : memref<256x256xbf16, #tpu.memory_space<vmem>>, vector<256x256xbf16>
    %cst = arith.constant dense<0.000000e+00> : vector<128x256xf32>
    %12 = tpu.matmul %10, %11, %cst {dimension_numbers = #tpu.dot_dimension_numbers<[1], [0], [0], [1], [0, 0, 1, 1], [], []>} : vector<128x256xbf16>, vector<256x256xbf16>, vector<128x256xf32> -> vector<128x256xf32>
    %13 = vector.extract_strided_slice %12 {offsets = [0, 0], sizes = [128, 128], strides = [1, 1]} : vector<128x256xf32> to vector<128x128xf32>
    %14 = vector.extract_strided_slice %12 {offsets = [0, 128], sizes = [128, 128], strides = [1, 1]} : vector<128x256xf32> to vector<128x128xf32>
    %15 = arith.mulf %13, %13 : vector<128x128xf32>
    %16 = arith.mulf %14, %14 : vector<128x128xf32>
    %17 = arith.addf %15, %16 : vector<128x128xf32>
    %cst_7 = arith.constant 1.000000e-10 : f32
    %18 = vector.broadcast %cst_7 : f32 to vector<128x128xf32>
    %19 = arith.maximumf %17, %18 : vector<128x128xf32>
    %20 = math.sqrt %19 : vector<128x128xf32>
    %21 = tpu.transpose %20, [1, 0] : vector<128x128xf32> -> vector<128x128xf32>
    %22 = arith.truncf %21 : vector<128x128xf32> to vector<128x128xbf16>
    %c0_8 = arith.constant 0 : index
    %c0_9 = arith.constant 0 : index
    %23 = vector.load %arg5[%c0_8, %c0_9] : memref<40x128xbf16, #tpu.memory_space<vmem>>, vector<40x128xbf16>
    %cst_10 = arith.constant dense<0.000000e+00> : vector<40x128xf32>
    %24 = tpu.matmul %23, %22, %cst_10 {dimension_numbers = #tpu.dot_dimension_numbers<[1], [0], [0], [1], [0, 0, 1, 1], [], []>} : vector<40x128xbf16>, vector<128x128xbf16>, vector<40x128xf32> -> vector<40x128xf32>
    %cst_11 = arith.constant 1.000000e-10 : f32
    %25 = vector.broadcast %cst_11 : f32 to vector<40x128xf32>
    %26 = arith.maximumf %24, %25 : vector<40x128xf32>
    %27 = math.log %26 : vector<40x128xf32>
    %cst_12 = arith.constant 0.434294492 : f32
    %28 = vector.broadcast %cst_12 : f32 to vector<40x128xf32>
    %29 = arith.mulf %27, %28 : vector<40x128xf32>
    %c0_13 = arith.constant 0 : index
    %c0_14 = arith.constant 0 : index
    %c0_15 = arith.constant 0 : index
    %30 = vector.load %arg6[%c0_13, %c0_14, %c0_15] : memref<1x40x128xf32, #tpu.memory_space<vmem>>, vector<1x40x128xf32>
    %31 = vector.shape_cast %30 : vector<1x40x128xf32> to vector<40x128xf32>
    %32 = vector.shape_cast %29 : vector<40x128xf32> to vector<1x40x128xf32>
    tpu.vector_store %arg6[%c0_13, %c0_14, %c0_15], %32 {strides = array<i32>} : memref<1x40x128xf32, #tpu.memory_space<vmem>>, vector<1x40x128xf32>,
    return
  }
  func.func @transform_0(%arg0: i32, %arg1: i32) -> (i32, i32, i32) {
    %c0_i32 = arith.constant 0 : i32
    %c0_i32_0 = arith.constant 0 : i32
    return %arg0, %arg1, %c0_i32 : i32, i32, i32
  }
  func.func @transform_1(%arg0: i32, %arg1: i32) -> (i32, i32, i32) {
    %c1_i32 = arith.constant 1 : i32
    %0 = arith.addi %arg1, %c1_i32 : i32
    %c16_i32 = arith.constant 16 : i32
    %1 = arith.muli %0, %c16_i32 : i32
    %c0_i32 = arith.constant 0 : i32
    %c0_i32_0 = arith.constant 0 : i32
    return %arg0, %1, %c0_i32 : i32, i32, i32
  }
  func.func @transform_2(%arg0: i32, %arg1: i32) -> (i32, i32) {
    %c0_i32 = arith.constant 0 : i32
    %c0_i32_0 = arith.constant 0 : i32
    %c0_i32_1 = arith.constant 0 : i32
    return %c0_i32, %c0_i32_0 : i32, i32
  }
  func.func @transform_3(%arg0: i32, %arg1: i32) -> (i32, i32) {
    %c0_i32 = arith.constant 0 : i32
    %c0_i32_0 = arith.constant 0 : i32
    %c0_i32_1 = arith.constant 0 : i32
    return %c0_i32, %c0_i32_0 : i32, i32
  }
  func.func @transform_4(%arg0: i32, %arg1: i32) -> (i32, i32, i32) {
    %c0_i32 = arith.constant 0 : i32
    %c0_i32_0 = arith.constant 0 : i32
    return %arg0, %c0_i32, %arg1 : i32, i32, i32
  }
}

</mosaic_0001>

<llo_original>
// kernel: tpu_custom_call.1
$region0: #{tpu_custom_call.1}
  #allocation0 [shape = 'u32[]', space=smem, size = 0x4, offset = 0x4, fixed_abs, tag = 'smem constant byte address 0x4 - core index']
  #allocation1 [shape = 'u32[144,128]{1,0:T(1,128)}', space=vmem, size = 0x12000, scoped, tag = 'internal scratch']
  %s0 = inlined_call_operand.vmem [shape: f32[2,256,64], index: 0, kind: input, shape index: {}]
  %s1 = inlined_call_operand.vmem [shape: f32[2,256,64], index: 1, kind: input, shape index: {}]
  %s2 = inlined_call_operand.vmem [shape: bf16[256,256], index: 2, kind: input, shape index: {}]
  %s3 = inlined_call_operand.vmem [shape: bf16[40,128], index: 3, kind: input, shape index: {}]
  %s4 = inlined_call_operand.hbm [shape: f32[2,40,128], index: 4, kind: output, shape index: {}]
  %s5 = sld [smem:[#allocation0]]
  $region49: #{tpu_custom_call.1} parent=0
    _
  %s7 = ssub.s32 1, %s5
  %s8 = scalar_select 0, %s7, %s5
  $region1: #{tpu_custom_call.1} parent=0
    #allocation2 [shape = 'u8[40960]{0}', space=vmem, size = 0xa000, scoped, tag = 'output window, operand 0']
    #allocation3 [shape = 's32[2]{0}', space=sflag, size = 0x8, scoped, tag = 'scoped memory for tpu_custom_call.1']
    %9 = vsyncpa [#allocation3], 0
    %s10 = scalar_lea.sflag [#allocation3], 1
    %11 = vsyncpa %s10, 0
    loop: start=0, step=1, limit=4
    $region2: #{tpu_custom_call.1} parent=1 // loop_pre_header
      _
    $region3: #{tpu_custom_call.1} parent=1 // loop_header
      %s13 = sphi 0, %s17
      %p14 = scmp.ge.s32.totalorder %s13, 4
      %s20 = sphi 0, %s32
      %s21 = sphi 0, %s28
      %s22 = sphi 0, %s20
      %s23 = sphi 0, %s21
      %s24 = sphi 0, %s22
      %s25 = sphi 0, %s23
      %s37 = sphi 0, %s39
      %s40 = sphi 0, %s37
      %s41 = sphi 0, %s40
      %s57 = sphi 0, %s41
      %s69 = sphi 0, %s71
      %s72 = sphi 0, %s69
      %s73 = sphi 0, %s72
      %s89 = sphi 0, %s73
      %s93 = sphi 0, %s93
      %s95 = sphi 0, %s93
      %s96 = sphi 0, %s95
      %s110 = sphi 0, %s96
      %s114 = sphi 0, %s114
      %s116 = sphi 0, %s114
      %s117 = sphi 0, %s116
      %s131 = sphi 0, %s117
      %s139 = sphi 0, %s141
      %s142 = sphi 0, %s139
      %s143 = sphi 0, %s142
      %s159 = sphi 0, %s143
    $region4: #{tpu_custom_call.1} parent=1 // loop_header_branch
      %16 = sbr.rel (%p14) target = $region8
    $region5: #{tpu_custom_call.1} parent=1 // loop_body
      %s18 = ssub.s32 %s13, 1
      %s19 = ssub.s32 %s13, 2
      %s26 = sadd.s32 1, %s21
      %p27 = scmp.ge.s32.totalorder %s26, 1
      %s28 = scalar_select %p27, 0, %s26
      %s29 = sadd.s32 1, %s20
      %s30 = scalar_select %p27, %s29, %s20
      %p31 = scmp.ge.s32.totalorder %s30, 2
      %s32 = scalar_select %p31, 0, %s30
      %s33 = ssub.s32 %s20, %s32
      %s34 = ssub.s32 %s21, %s28
      %s35 = sor.u32 %s33, %s34
      %p36 = scmp.eq.s32.totalorder %s35, 0
      %s38 = sadd.s32 %s37, 1
      %s39 = scalar_select %p36, %s37, %s38
      %p42 = pneg %p36
      %p43 = scmp.eq.s32.totalorder %s13, 1
      %p44 = por %p42, %p43
      %p45 = scmp.ne.s32.totalorder %s37, %s40
      %p46 = scmp.eq.s32.totalorder %s13, 0
      %p47 = por %p45, %p46
      %p48 = scmp.ne.s32.totalorder %s37, %s40
      %p49 = scmp.eq.s32.totalorder %s18, 1
      %p50 = por %p48, %p49
      %p51 = scmp.ne.s32.totalorder %s40, %s41
      %p52 = scmp.eq.s32.totalorder %s18, 0
      %p53 = por %p51, %p52
      %p54 = scmp.ne.s32.totalorder %s40, %s41
      %p55 = scmp.eq.s32.totalorder %s19, 1
      %p56 = por %p54, %p55
      %p58 = scmp.ne.s32.totalorder %s41, %s57
      %p59 = scmp.eq.s32.totalorder %s19, 0
      %p60 = por %p58, %p59
      %s61 = sadd.s32 %s21, 1
      %s62 = smul.u32 %s61, 16
      %s63 = sadd.s32 %s28, 1
      %s64 = smul.u32 %s63, 16
      %s65 = ssub.s32 %s20, %s32
      %s66 = ssub.s32 %s62, %s64
      %s67 = sor.u32 %s65, %s66
      %p68 = scmp.eq.s32.totalorder %s67, 0
      %s70 = sadd.s32 %s69, 1
      %s71 = scalar_select %p68, %s69, %s70
      %p74 = pneg %p68
      %p75 = scmp.eq.s32.totalorder %s13, 1
      %p76 = por %p74, %p75
      %p77 = scmp.ne.s32.totalorder %s69, %s72
      %p78 = scmp.eq.s32.totalorder %s13, 0
      %p79 = por %p77, %p78
      %p80 = scmp.ne.s32.totalorder %s69, %s72
      %p81 = scmp.eq.s32.totalorder %s18, 1
      %p82 = por %p80, %p81
      %p83 = scmp.ne.s32.totalorder %s72, %s73
      %p84 = scmp.eq.s32.totalorder %s18, 0
      %p85 = por %p83, %p84
      %p86 = scmp.ne.s32.totalorder %s72, %s73
      %p87 = scmp.eq.s32.totalorder %s19, 1
      %p88 = por %p86, %p87
      %p90 = scmp.ne.s32.totalorder %s73, %s89
      %p91 = scmp.eq.s32.totalorder %s19, 0
      %p92 = por %p90, %p91
      %s94 = sadd.s32 %s93, 1
      %p97 = scmp.eq.s32.totalorder %s13, 1
      %p98 = scmp.ne.s32.totalorder %s93, %s95
      %p99 = scmp.eq.s32.totalorder %s13, 0
      %p100 = por %p98, %p99
      %p101 = scmp.ne.s32.totalorder %s93, %s95
      %p102 = scmp.eq.s32.totalorder %s18, 1
      %p103 = por %p101, %p102
      %p104 = scmp.ne.s32.totalorder %s95, %s96
      %p105 = scmp.eq.s32.totalorder %s18, 0
      %p106 = por %p104, %p105
      %p107 = scmp.ne.s32.totalorder %s95, %s96
      %p108 = scmp.eq.s32.totalorder %s19, 1
      %p109 = por %p107, %p108
      %p111 = scmp.ne.s32.totalorder %s96, %s110
      %p112 = scmp.eq.s32.totalorder %s19, 0
      %p113 = por %p111, %p112
      %s115 = sadd.s32 %s114, 1
      %p118 = scmp.eq.s32.totalorder %s13, 1
      %p119 = scmp.ne.s32.totalorder %s114, %s116
      %p120 = scmp.eq.s32.totalorder %s13, 0
      %p121 = por %p119, %p120
      %p122 = scmp.ne.s32.totalorder %s114, %s116
      %p123 = scmp.eq.s32.totalorder %s18, 1
      %p124 = por %p122, %p123
      %p125 = scmp.ne.s32.totalorder %s116, %s117
      %p126 = scmp.eq.s32.totalorder %s18, 0
      %p127 = por %p125, %p126
      %p128 = scmp.ne.s32.totalorder %s116, %s117
      %p129 = scmp.eq.s32.totalorder %s19, 1
      %p130 = por %p128, %p129
      %p132 = scmp.ne.s32.totalorder %s117, %s131
      %p133 = scmp.eq.s32.totalorder %s19, 0
      %p134 = por %p132, %p133
      %s135 = ssub.s32 %s20, %s32
      %s136 = ssub.s32 %s21, %s28
      %s137 = sor.u32 %s135, %s136
      %p138 = scmp.eq.s32.totalorder %s137, 0
      %s140 = sadd.s32 %s139, 1
      %s141 = scalar_select %p138, %s139, %s140
      %p144 = pneg %p138
      %p145 = scmp.eq.s32.totalorder %s13, 1
      %p146 = por %p144, %p145
      %p147 = scmp.ne.s32.totalorder %s139, %s142
      %p148 = scmp.eq.s32.totalorder %s13, 0
      %p149 = por %p147, %p148
      %p150 = scmp.ne.s32.totalorder %s139, %s142
      %p151 = scmp.eq.s32.totalorder %s18, 1
      %p152 = por %p150, %p151
      %p153 = scmp.ne.s32.totalorder %s142, %s143
      %p154 = scmp.eq.s32.totalorder %s18, 0
      %p155 = por %p153, %p154
      %p156 = scmp.ne.s32.totalorder %s142, %s143
      %p157 = scmp.eq.s32.totalorder %s19, 1
      %p158 = por %p156, %p157
      %p160 = scmp.ne.s32.totalorder %s143, %s159
      %p161 = scmp.eq.s32.totalorder %s19, 0
      %p162 = por %p160, %p161
      %p163 = scmp.le.s32.totalorder 1, %s13
      %p164 = scmp.lt.s32.totalorder %s13, 3
      %p165 = pnand %p163, %p164
      %p166 = pneg %p165
      // Predicated region
      $region9: #{tpu_custom_call.1} parent=5 // pred_check
        _
      $region10: #{tpu_custom_call.1} parent=5 // pred_check_branch
        %168 = sbr.rel (%p165) target = $region12
      $region11: #{tpu_custom_call.1} parent=5 // pred_region
        %s169 = ssub.s32 %s13, 1
        // Predicated region
        $region13: #{tpu_custom_call.1} parent=11 // pred_check
          %p170 = pneg %p106
        $region14: #{tpu_custom_call.1} parent=11 // pred_check_branch
          %172 = sbr.rel (%p170) target = $region16
        $region15: #{tpu_custom_call.1} parent=11 // pred_region
          _
        $region16: #{tpu_custom_call.1} parent=11 // pred_fallthru
          _
        // Predicated region
        $region17: #{tpu_custom_call.1} parent=11 // pred_check
          %p173 = pneg %p127
        $region18: #{tpu_custom_call.1} parent=11 // pred_check_branch
          %175 = sbr.rel (%p173) target = $region20
        $region19: #{tpu_custom_call.1} parent=11 // pred_region
          _
        $region20: #{tpu_custom_call.1} parent=11 // pred_fallthru
          _
      $region12: #{tpu_custom_call.1} parent=5 // pred_fallthru
        _
      %p176 = scmp.lt.s32.totalorder %s13, 2
      // Predicated region
      $region21: #{tpu_custom_call.1} parent=5 // pred_check
        %p177 = pneg %p176
      $region22: #{tpu_custom_call.1} parent=5 // pred_check_branch
        %179 = sbr.rel (%p177) target = $region24
      $region23: #{tpu_custom_call.1} parent=5 // pred_region
        // Predicated region
        $region25: #{tpu_custom_call.1} parent=23 // pred_check
          %p180 = pneg %p47
        $region26: #{tpu_custom_call.1} parent=23 // pred_check_branch
          %182 = sbr.rel (%p180) target = $region28
        $region27: #{tpu_custom_call.1} parent=23 // pred_region
          %s183 = smul.u32 16, %s21
          %p184 = scmp.lt.s32.totalorder %s20, 1
          %s185 = scalar_select %p184, %s20, 1
          %p186 = scmp.lt.s32.totalorder %s183, 31
          %s187 = scalar_select %p186, %s183, 31
          %s188 = smul.addr %s185, 32
          %s189 = sadd.s32 %s187, %s188
          %s190 = smul.addr %s189, 8
          %s191 = scalar_lea.vmem %s0, %s190
          %s192 = smul.u32 16, %s21
        $region28: #{tpu_custom_call.1} parent=23 // pred_fallthru
          _
        // Predicated region
        $region29: #{tpu_custom_call.1} parent=23 // pred_check
          %p193 = pneg %p79
        $region30: #{tpu_custom_call.1} parent=23 // pred_check_branch
          %195 = sbr.rel (%p193) target = $region32
        $region31: #{tpu_custom_call.1} parent=23 // pred_region
          %s196 = sadd.s32 %s21, 1
          %s197 = smul.u32 %s196, 16
          %p198 = scmp.lt.s32.totalorder %s20, 1
          %s199 = scalar_select %p198, %s20, 1
          %p200 = scmp.lt.s32.totalorder %s197, 31
          %s201 = scalar_select %p200, %s197, 31
          %s202 = smul.addr %s199, 32
          %s203 = sadd.s32 %s201, %s202
          %s204 = smul.addr %s203, 8
          %s205 = scalar_lea.vmem %s1, %s204
          %s206 = sadd.s32 %s21, 1
          %s207 = smul.u32 %s206, 16
        $region32: #{tpu_custom_call.1} parent=23 // pred_fallthru
          _
      $region24: #{tpu_custom_call.1} parent=5 // pred_fallthru
        _
      %p208 = scmp.le.s32.totalorder 1, %s13
      %p209 = scmp.lt.s32.totalorder %s13, 3
      %p210 = pnand %p208, %p209
      %p211 = pneg %p210
      // Predicated region
      $region33: #{tpu_custom_call.1} parent=5 // pred_check
        _
      $region34: #{tpu_custom_call.1} parent=5 // pred_check_branch
        %213 = sbr.rel (%p210) target = $region36
      $region35: #{tpu_custom_call.1} parent=5 // pred_region
        %s214 = ssub.s32 %s13, 1
        %s215 = smul.u32 16, %s23
        %p216 = scmp.lt.s32.totalorder %s22, 1
        %s217 = scalar_select %p216, %s22, 1
        %p218 = scmp.lt.s32.totalorder %s215, 31
        %s219 = scalar_select %p218, %s215, 31
        %s220 = smul.addr %s217, 32
        %s221 = sadd.s32 %s219, %s220
        %s222 = smul.addr %s221, 8
        %s223 = scalar_lea.vmem %s0, %s222
        %p224 = pneg %p53
        %p225 = pneg %p50
        %s226 = sadd.s32 %s23, 1
        %s227 = smul.u32 %s226, 16
        %p228 = scmp.lt.s32.totalorder %s22, 1
        %s229 = scalar_select %p228, %s22, 1
        %p230 = scmp.lt.s32.totalorder %s227, 31
        %s231 = scalar_select %p230, %s227, 31
        %s232 = smul.addr %s229, 32
        %s233 = sadd.s32 %s231, %s232
        %s234 = smul.addr %s233, 8
        %s235 = scalar_lea.vmem %s1, %s234
        %p236 = pneg %p85
        %p237 = pneg %p82
        %p238 = pneg %p106
        %p239 = pneg %p103
        %p240 = pneg %p127
        %p241 = pneg %p124
        %p242 = pneg %p155
        %p243 = pneg %p152
        %s244 = sand.u32 %s142, 1
        %s245 = scalar_lea.sflag [#allocation3], %s244
        %s246 = sand.u32 %s142, 1
        %s247 = smul.addr %s246, 40
        %s248 = scalar_lea.vmem [#allocation2], %s247
        %s249 = smul.u32 16, %s23
        %p250 = scmp.lt.s32.totalorder %s22, 1
        %s251 = scalar_select %p250, %s22, 1
        %p252 = scmp.lt.s32.totalorder %s249, 31
        %s253 = scalar_select %p252, %s249, 31
        %s254 = smul.addr %s251, 32
        %s255 = sadd.s32 %s253, %s254
        %s256 = smul.addr %s255, 8
        %s257 = scalar_lea.vmem %s0, %s256
        %s258 = smul.u32 16, %s23
        %s259 = sadd.s32 %s23, 1
        %s260 = smul.u32 %s259, 16
        %p261 = scmp.lt.s32.totalorder %s22, 1
        %s262 = scalar_select %p261, %s22, 1
        %p263 = scmp.lt.s32.totalorder %s260, 31
        %s264 = scalar_select %p263, %s260, 31
        %s265 = smul.addr %s262, 32
        %s266 = sadd.s32 %s264, %s265
        %s267 = smul.addr %s266, 8
        %s268 = scalar_lea.vmem %s1, %s267
        %s269 = sadd.s32 %s23, 1
        %s270 = smul.u32 %s269, 16
        %v272 = vld [vmem:[%s257] sm:$0xff]
        %v273 = vld [vmem:[%s257 + $0x8] sm:$0xff]
        %v274 = vld [vmem:[%s257 + $0x10] sm:$0xff]
        %v275 = vld [vmem:[%s257 + $0x18] sm:$0xff]
        %v276 = vld [vmem:[%s257 + $0x20] sm:$0xff]
        %v277 = vld [vmem:[%s257 + $0x28] sm:$0xff]
        %v278 = vld [vmem:[%s257 + $0x30] sm:$0xff]
        %v279 = vld [vmem:[%s257 + $0x38] sm:$0xff]
        %v280 = vld [vmem:[%s257 + $0x40] sm:$0xff]
        %v281 = vld [vmem:[%s257 + $0x48] sm:$0xff]
        %v282 = vld [vmem:[%s257 + $0x50] sm:$0xff]
        %v283 = vld [vmem:[%s257 + $0x58] sm:$0xff]
        %v284 = vld [vmem:[%s257 + $0x60] sm:$0xff]
        %v285 = vld [vmem:[%s257 + $0x68] sm:$0xff]
        %v286 = vld [vmem:[%s257 + $0x70] sm:$0xff]
        %v287 = vld [vmem:[%s257 + $0x78] sm:$0xff]
        %v288 = vld [vmem:[%s268] sm:$0xff]
        %vm306 = vcmask 1046528
        %v307 = vrot.slane %v272, 1
        %v308 = vrot.slane %v273, 1
        %v309 = vsel %vm306, %v307, %v308
        %v310 = vrot.slane %v274, 1
        %v311 = vsel %vm306, %v308, %v310
        %v312 = vrot.slane %v275, 1
        %v313 = vsel %vm306, %v310, %v312
        %v314 = vrot.slane %v276, 1
        %v315 = vsel %vm306, %v312, %v314
        %v316 = vrot.slane %v277, 1
        %v317 = vsel %vm306, %v314, %v316
        %v318 = vrot.slane %v278, 1
        %v319 = vsel %vm306, %v316, %v318
        %v320 = vrot.slane %v279, 1
        %v321 = vsel %vm306, %v318, %v320
        %v322 = vrot.slane %v280, 1
        %v323 = vsel %vm306, %v320, %v322
        %v324 = vrot.slane %v281, 1
        %v325 = vsel %vm306, %v322, %v324
        %v326 = vrot.slane %v282, 1
        %v327 = vsel %vm306, %v324, %v326
        %v328 = vrot.slane %v283, 1
        %v329 = vsel %vm306, %v326, %v328
        %v330 = vrot.slane %v284, 1
        %v331 = vsel %vm306, %v328, %v330
        %v332 = vrot.slane %v285, 1
        %v333 = vsel %vm306, %v330, %v332
        %v334 = vrot.slane %v286, 1
        %v335 = vsel %vm306, %v332, %v334
        %v336 = vrot.slane %v287, 1
        %v337 = vsel %vm306, %v334, %v336
        %v338 = vrot.slane %v288, 1
        %v339 = vsel %vm306, %v336, %v338
        %340 = vrot.lane.b32.xlu0 %v309, 64
        %v341 = vpop.permute.xlu0 %340
        %342 = vrot.lane.b32.xlu0 %v311, 64
        %v343 = vpop.permute.xlu0 %342
        %344 = vrot.lane.b32.xlu0 %v313, 64
        %v345 = vpop.permute.xlu0 %344
        %346 = vrot.lane.b32.xlu0 %v315, 64
        %v347 = vpop.permute.xlu0 %346
        %348 = vrot.lane.b32.xlu0 %v317, 64
        %v349 = vpop.permute.xlu0 %348
        %350 = vrot.lane.b32.xlu0 %v319, 64
        %v351 = vpop.permute.xlu0 %350
        %352 = vrot.lane.b32.xlu0 %v321, 64
        %v353 = vpop.permute.xlu0 %352
        %354 = vrot.lane.b32.xlu0 %v323, 64
        %v355 = vpop.permute.xlu0 %354
        %356 = vrot.lane.b32.xlu0 %v325, 64
        %v357 = vpop.permute.xlu0 %356
        %358 = vrot.lane.b32.xlu0 %v327, 64
        %v359 = vpop.permute.xlu0 %358
        %360 = vrot.lane.b32.xlu0 %v329, 64
        %v361 = vpop.permute.xlu0 %360
        %362 = vrot.lane.b32.xlu0 %v331, 64
        %v363 = vpop.permute.xlu0 %362
        %364 = vrot.lane.b32.xlu0 %v333, 64
        %v365 = vpop.permute.xlu0 %364
        %366 = vrot.lane.b32.xlu0 %v335, 64
        %v367 = vpop.permute.xlu0 %366
        %368 = vrot.lane.b32.xlu0 %v337, 64
        %v369 = vpop.permute.xlu0 %368
        %370 = vrot.lane.b32.xlu0 %v339, 64
        %v371 = vpop.permute.xlu0 %370
        %vm388 = vcmask 1045504
        %v389 = vrot.slane %v272, 2
        %v390 = vrot.slane %v273, 2
        %v391 = vsel %vm388, %v389, %v390
        %v392 = vrot.slane %v274, 2
        %v393 = vsel %vm388, %v390, %v392
        %v394 = vrot.slane %v275, 2
        %v395 = vsel %vm388, %v392, %v394
        %v396 = vrot.slane %v276, 2
        %v397 = vsel %vm388, %v394, %v396
        %v398 = vrot.slane %v277, 2
        %v399 = vsel %vm388, %v396, %v398
        %v400 = vrot.slane %v278, 2
        %v401 = vsel %vm388, %v398, %v400
        %v402 = vrot.slane %v279, 2
        %v403 = vsel %vm388, %v400, %v402
        %v404 = vrot.slane %v280, 2
        %v405 = vsel %vm388, %v402, %v404
        %v406 = vrot.slane %v281, 2
        %v407 = vsel %vm388, %v404, %v406
        %v408 = vrot.slane %v282, 2
        %v409 = vsel %vm388, %v406, %v408
        %v410 = vrot.slane %v283, 2
        %v411 = vsel %vm388, %v408, %v410
        %v412 = vrot.slane %v284, 2
        %v413 = vsel %vm388, %v410, %v412
        %v414 = vrot.slane %v285, 2
        %v415 = vsel %vm388, %v412, %v414
        %v416 = vrot.slane %v286, 2
        %v417 = vsel %vm388, %v414, %v416
        %v418 = vrot.slane %v287, 2
        %v419 = vsel %vm388, %v416, %v418
        %v420 = vrot.slane %v288, 2
        %v421 = vsel %vm388, %v418, %v420
        %vm438 = vcmask 1044480
        %v439 = vrot.slane %v272, 3
        %v440 = vrot.slane %v273, 3
        %v441 = vsel %vm438, %v439, %v440
        %v442 = vrot.slane %v274, 3
        %v443 = vsel %vm438, %v440, %v442
        %v444 = vrot.slane %v275, 3
        %v445 = vsel %vm438, %v442, %v444
        %v446 = vrot.slane %v276, 3
        %v447 = vsel %vm438, %v444, %v446
        %v448 = vrot.slane %v277, 3
        %v449 = vsel %vm438, %v446, %v448
        %v450 = vrot.slane %v278, 3
        %v451 = vsel %vm438, %v448, %v450
        %v452 = vrot.slane %v279, 3
        %v453 = vsel %vm438, %v450, %v452
        %v454 = vrot.slane %v280, 3
        %v455 = vsel %vm438, %v452, %v454
        %v456 = vrot.slane %v281, 3
        %v457 = vsel %vm438, %v454, %v456
        %v458 = vrot.slane %v282, 3
        %v459 = vsel %vm438, %v456, %v458
        %v460 = vrot.slane %v283, 3
        %v461 = vsel %vm438, %v458, %v460
        %v462 = vrot.slane %v284, 3
        %v463 = vsel %vm438, %v460, %v462
        %v464 = vrot.slane %v285, 3
        %v465 = vsel %vm438, %v462, %v464
        %v466 = vrot.slane %v286, 3
        %v467 = vsel %vm438, %v464, %v466
        %v468 = vrot.slane %v287, 3
        %v469 = vsel %vm438, %v466, %v468
        %v470 = vrot.slane %v288, 3
        %v471 = vsel %vm438, %v468, %v470
        %472 = vrot.lane.b32.xlu0 %v441, 64
        %v473 = vpop.permute.xlu0 %472
        %474 = vrot.lane.b32.xlu0 %v443, 64
        %v475 = vpop.permute.xlu0 %474
        %476 = vrot.lane.b32.xlu0 %v445, 64
        %v477 = vpop.permute.xlu0 %476
        %478 = vrot.lane.b32.xlu0 %v447, 64
        %v479 = vpop.permute.xlu0 %478
        %480 = vrot.lane.b32.xlu0 %v449, 64
        %v481 = vpop.permute.xlu0 %480
        %482 = vrot.lane.b32.xlu0 %v451, 64
        %v483 = vpop.permute.xlu0 %482
        %484 = vrot.lane.b32.xlu0 %v453, 64
        %v485 = vpop.permute.xlu0 %484
        %486 = vrot.lane.b32.xlu0 %v455, 64
        %v487 = vpop.permute.xlu0 %486
        %488 = vrot.lane.b32.xlu0 %v457, 64
        %v489 = vpop.permute.xlu0 %488
        %490 = vrot.lane.b32.xlu0 %v459, 64
        %v491 = vpop.permute.xlu0 %490
        %492 = vrot.lane.b32.xlu0 %v461, 64
        %v493 = vpop.permute.xlu0 %492
        %494 = vrot.lane.b32.xlu0 %v463, 64
        %v495 = vpop.permute.xlu0 %494
        %496 = vrot.lane.b32.xlu0 %v465, 64
        %v497 = vpop.permute.xlu0 %496
        %498 = vrot.lane.b32.xlu0 %v467, 64
        %v499 = vpop.permute.xlu0 %498
        %500 = vrot.lane.b32.xlu0 %v469, 64
        %v501 = vpop.permute.xlu0 %500
        %502 = vrot.lane.b32.xlu0 %v471, 64
        %v503 = vpop.permute.xlu0 %502
        %vm520 = vcmask 523264
        %v521 = vsel %vm520, %v272, %v341
        %v522 = vsel %vm520, %v273, %v343
        %v523 = vsel %vm520, %v274, %v345
        %v524 = vsel %vm520, %v275, %v347
        %v525 = vsel %vm520, %v276, %v349
        %v526 = vsel %vm520, %v277, %v351
        %v527 = vsel %vm520, %v278, %v353
        %v528 = vsel %vm520, %v279, %v355
        %v529 = vsel %vm520, %v280, %v357
        %v530 = vsel %vm520, %v281, %v359
        %v531 = vsel %vm520, %v282, %v361
        %v532 = vsel %vm520, %v283, %v363
        %v533 = vsel %vm520, %v284, %v365
        %v534 = vsel %vm520, %v285, %v367
        %v535 = vsel %vm520, %v286, %v369
        %v536 = vsel %vm520, %v287, %v371
        %v537 = vsel %vm520, %v391, %v473
        %v538 = vsel %vm520, %v393, %v475
        %v539 = vsel %vm520, %v395, %v477
        %v540 = vsel %vm520, %v397, %v479
        %v541 = vsel %vm520, %v399, %v481
        %v542 = vsel %vm520, %v401, %v483
        %v543 = vsel %vm520, %v403, %v485
        %v544 = vsel %vm520, %v405, %v487
        %v545 = vsel %vm520, %v407, %v489
        %v546 = vsel %vm520, %v409, %v491
        %v547 = vsel %vm520, %v411, %v493
        %v548 = vsel %vm520, %v413, %v495
        %v549 = vsel %vm520, %v415, %v497
        %v550 = vsel %vm520, %v417, %v499
        %v551 = vsel %vm520, %v419, %v501
        %v552 = vsel %vm520, %v421, %v503
        %v553 = vpack.c.bf16 %v522, %v521
        %v554 = vpack.c.bf16 %v538, %v537
        %v555 = vpack.c.bf16 %v524, %v523
        %v556 = vpack.c.bf16 %v540, %v539
        %v557 = vpack.c.bf16 %v526, %v525
        %v558 = vpack.c.bf16 %v542, %v541
        %v559 = vpack.c.bf16 %v528, %v527
        %v560 = vpack.c.bf16 %v544, %v543
        %v561 = vpack.c.bf16 %v530, %v529
        %v562 = vpack.c.bf16 %v546, %v545
        %v563 = vpack.c.bf16 %v532, %v531
        %v564 = vpack.c.bf16 %v548, %v547
        %v565 = vpack.c.bf16 %v534, %v533
        %v566 = vpack.c.bf16 %v550, %v549
        %v567 = vpack.c.bf16 %v536, %v535
        %v568 = vpack.c.bf16 %v552, %v551
        %v569 = vld [vmem:[%s2] sm:$0xff]
        %v570 = vld [vmem:[%s2 + $0x8] sm:$0xff]
        %v571 = vld [vmem:[%s2 + $0x10] sm:$0xff]
        %v572 = vld [vmem:[%s2 + $0x18] sm:$0xff]
        %v573 = vld [vmem:[%s2 + $0x20] sm:$0xff]
        %v574 = vld [vmem:[%s2 + $0x28] sm:$0xff]
        %v575 = vld [vmem:[%s2 + $0x30] sm:$0xff]
        %v576 = vld [vmem:[%s2 + $0x38] sm:$0xff]
        %v577 = vld [vmem:[%s2 + $0x40] sm:$0xff]
        %v578 = vld [vmem:[%s2 + $0x48] sm:$0xff]
        %v579 = vld [vmem:[%s2 + $0x50] sm:$0xff]
        %v580 = vld [vmem:[%s2 + $0x58] sm:$0xff]
        %v581 = vld [vmem:[%s2 + $0x60] sm:$0xff]
        %v582 = vld [vmem:[%s2 + $0x68] sm:$0xff]
        %v583 = vld [vmem:[%s2 + $0x70] sm:$0xff]
        %v584 = vld [vmem:[%s2 + $0x78] sm:$0xff]
        %v585 = vld [vmem:[%s2 + $0x80] sm:$0xff]
        %v586 = vld [vmem:[%s2 + $0x88] sm:$0xff]
        %v587 = vld [vmem:[%s2 + $0x90] sm:$0xff]
        %v588 = vld [vmem:[%s2 + $0x98] sm:$0xff]
        %v589 = vld [vmem:[%s2 + $0xa0] sm:$0xff]
        %v590 = vld [vmem:[%s2 + $0xa8] sm:$0xff]
        %v591 = vld [vmem:[%s2 + $0xb0] sm:$0xff]
        %v592 = vld [vmem:[%s2 + $0xb8] sm:$0xff]
        %v593 = vld [vmem:[%s2 + $0xc0] sm:$0xff]
        %v594 = vld [vmem:[%s2 + $0xc8] sm:$0xff]
        %v595 = vld [vmem:[%s2 + $0xd0] sm:$0xff]
        %v596 = vld [vmem:[%s2 + $0xd8] sm:$0xff]
        %v597 = vld [vmem:[%s2 + $0xe0] sm:$0xff]
        %v598 = vld [vmem:[%s2 + $0xe8] sm:$0xff]
        %v599 = vld [vmem:[%s2 + $0xf0] sm:$0xff]
        %v600 = vld [vmem:[%s2 + $0xf8] sm:$0xff]
        %v633 = vunpack.c.l.b16 %v569
        %v634 = vunpack.c.h.b16 %v569
        %v635 = vunpack.c.l.b16 %v570
        %v636 = vunpack.c.h.b16 %v570
        %v637 = vunpack.c.l.b16 %v571
        %v638 = vunpack.c.h.b16 %v571
        %v639 = vunpack.c.l.b16 %v572
        %v640 = vunpack.c.h.b16 %v572
        %v641 = vunpack.c.l.b16 %v573
        %v642 = vunpack.c.h.b16 %v573
        %v643 = vunpack.c.l.b16 %v574
        %v644 = vunpack.c.h.b16 %v574
        %v645 = vunpack.c.l.b16 %v575
        %v646 = vunpack.c.h.b16 %v575
        %v647 = vunpack.c.l.b16 %v576
        %v648 = vunpack.c.h.b16 %v576
        %v649 = vunpack.c.l.b16 %v577
        %v650 = vunpack.c.h.b16 %v577
        %v651 = vunpack.c.l.b16 %v578
        %v652 = vunpack.c.h.b16 %v578
        %v653 = vunpack.c.l.b16 %v579
        %v654 = vunpack.c.h.b16 %v579
        %v655 = vunpack.c.l.b16 %v580
        %v656 = vunpack.c.h.b16 %v580
        %v657 = vunpack.c.l.b16 %v581
        %v658 = vunpack.c.h.b16 %v581
        %v659 = vunpack.c.l.b16 %v582
        %v660 = vunpack.c.h.b16 %v582
        %v661 = vunpack.c.l.b16 %v583
        %v662 = vunpack.c.h.b16 %v583
        %v663 = vunpack.c.l.b16 %v584
        %v664 = vunpack.c.h.b16 %v584
        %v665 = vunpack.c.l.b16 %v585
        %v666 = vunpack.c.h.b16 %v585
        %v667 = vunpack.c.l.b16 %v586
        %v668 = vunpack.c.h.b16 %v586
        %v669 = vunpack.c.l.b16 %v587
        %v670 = vunpack.c.h.b16 %v587
        %v671 = vunpack.c.l.b16 %v588
        %v672 = vunpack.c.h.b16 %v588
        %v673 = vunpack.c.l.b16 %v589
        %v674 = vunpack.c.h.b16 %v589
        %v675 = vunpack.c.l.b16 %v590
        %v676 = vunpack.c.h.b16 %v590
        %v677 = vunpack.c.l.b16 %v591
        %v678 = vunpack.c.h.b16 %v591
        %v679 = vunpack.c.l.b16 %v592
        %v680 = vunpack.c.h.b16 %v592
        %v681 = vunpack.c.l.b16 %v593
        %v682 = vunpack.c.h.b16 %v593
        %v683 = vunpack.c.l.b16 %v594
        %v684 = vunpack.c.h.b16 %v594
        %v685 = vunpack.c.l.b16 %v595
        %v686 = vunpack.c.h.b16 %v595
        %v687 = vunpack.c.l.b16 %v596
        %v688 = vunpack.c.h.b16 %v596
        %v689 = vunpack.c.l.b16 %v597
        %v690 = vunpack.c.h.b16 %v597
        %v691 = vunpack.c.l.b16 %v598
        %v692 = vunpack.c.h.b16 %v598
        %v693 = vunpack.c.l.b16 %v599
        %v694 = vunpack.c.h.b16 %v599
        %v695 = vunpack.c.l.b16 %v600
        %v696 = vunpack.c.h.b16 %v600
        %v697 = vpack.c.b16 %v635, %v633
        %v698 = vpack.c.b16 %v636, %v634
        %v699 = vpack.c.b16 %v639, %v637
        %v700 = vpack.c.b16 %v640, %v638
        %v701 = vpack.c.b16 %v643, %v641
        %v702 = vpack.c.b16 %v644, %v642
        %v703 = vpack.c.b16 %v647, %v645
        %v704 = vpack.c.b16 %v648, %v646
        %v705 = vpack.c.b16 %v651, %v649
        %v706 = vpack.c.b16 %v652, %v650
        %v707 = vpack.c.b16 %v655, %v653
        %v708 = vpack.c.b16 %v656, %v654
        %v709 = vpack.c.b16 %v659, %v657
        %v710 = vpack.c.b16 %v660, %v658
        %v711 = vpack.c.b16 %v663, %v661
        %v712 = vpack.c.b16 %v664, %v662
        %v713 = vpack.c.b16 %v667, %v665
        %v714 = vpack.c.b16 %v668, %v666
        %v715 = vpack.c.b16 %v671, %v669
        %v716 = vpack.c.b16 %v672, %v670
        %v717 = vpack.c.b16 %v675, %v673
        %v718 = vpack.c.b16 %v676, %v674
        %v719 = vpack.c.b16 %v679, %v677
        %v720 = vpack.c.b16 %v680, %v678
        %v721 = vpack.c.b16 %v683, %v681
        %v722 = vpack.c.b16 %v684, %v682
        %v723 = vpack.c.b16 %v687, %v685
        %v724 = vpack.c.b16 %v688, %v686
        %v725 = vpack.c.b16 %v691, %v689
        %v726 = vpack.c.b16 %v692, %v690
        %v727 = vpack.c.b16 %v695, %v693
        %v728 = vpack.c.b16 %v696, %v694
        %761 = vmatprep.subr.bf16.mxu0 %v712
        %762 = vmatpush1.bf16.msra.mxu0 %v711
        %763 = vmatprep.subr.bf16.mxu0 %v710
        %764 = vmatpush1.bf16.msra.mxu0 %v709
        %765 = vmatprep.subr.bf16.mxu0 %v708
        %766 = vmatpush1.bf16.msra.mxu0 %v707
        %767 = vmatprep.subr.bf16.mxu0 %v706
        %768 = vmatpush1.bf16.msra.mxu0 %v705
        %769 = vmatprep.subr.bf16.mxu0 %v704
        %770 = vmatpush1.bf16.msra.mxu0 %v703
        %771 = vmatprep.subr.bf16.mxu0 %v702
        %772 = vmatpush1.bf16.msra.mxu0 %v701
        %773 = vmatprep.subr.bf16.mxu0 %v700
        %774 = vmatpush1.bf16.msra.mxu0 %v699
        %775 = vmatprep.subr.bf16.mxu0 %v698
        %776 = vmatpush1.bf16.msra.mxu0 %v697
        %777 = vmatprep.subr.bf16.mxu0 %v728
        %778 = vmatpush2.bf16.msra.mxu0 %v727
        %779 = vmatprep.subr.bf16.mxu0 %v726
        %780 = vmatpush2.bf16.msra.mxu0 %v725
        %781 = vmatprep.subr.bf16.mxu0 %v724
        %782 = vmatpush2.bf16.msra.mxu0 %v723
        %783 = vmatprep.subr.bf16.mxu0 %v722
        %784 = vmatpush2.bf16.msra.mxu0 %v721
        %785 = vmatprep.subr.bf16.mxu0 %v720
        %786 = vmatpush2.bf16.msra.mxu0 %v719
        %787 = vmatprep.subr.bf16.mxu0 %v718
        %788 = vmatpush2.bf16.msra.mxu0 %v717
        %789 = vmatprep.subr.bf16.mxu0 %v716
        %790 = vmatpush2.bf16.msra.mxu0 %v715
        %791 = vmatprep.subr.bf16.mxu0 %v714
        %792 = vmatpush2.bf16.msra.mxu0 %v713
        %793 = vmatprep.mubr.bf16.mxu0 %v554
        %794 = vmatmul.mubr.bf16.gmra.mxu0 %v553
        %v795 = vpop.f32.mrf.mxu0
        %v796 = vadd.f32 0.0, %v795
        %v797 = vpop.f32.mrf.mxu0
        %v798 = vadd.f32 0.0, %v797
        %v799 = vpop.f32.mrf.mxu0
        %v800 = vadd.f32 0.0, %v799
        %v801 = vpop.f32.mrf.mxu0
        %v802 = vadd.f32 0.0, %v801
        %803 = vmatprep.mubr.bf16.mxu0 %v556
        %804 = vmatmul.mubr.bf16.gmra.mxu0 %v555
        %v805 = vpop.f32.mrf.mxu0
        %v806 = vadd.f32 0.0, %v805
        %v807 = vpop.f32.mrf.mxu0
        %v808 = vadd.f32 0.0, %v807
        %v809 = vpop.f32.mrf.mxu0
        %v810 = vadd.f32 0.0, %v809
        %v811 = vpop.f32.mrf.mxu0
        %v812 = vadd.f32 0.0, %v811
        %813 = vmatprep.mubr.bf16.mxu0 %v558
        %814 = vmatmul.mubr.bf16.gmra.mxu0 %v557
        %v815 = vpop.f32.mrf.mxu0
        %v816 = vadd.f32 0.0, %v815
        %v817 = vpop.f32.mrf.mxu0
        %v818 = vadd.f32 0.0, %v817
        %v819 = vpop.f32.mrf.mxu0
        %v820 = vadd.f32 0.0, %v819
        %v821 = vpop.f32.mrf.mxu0
        %v822 = vadd.f32 0.0, %v821
        %823 = vmatprep.mubr.bf16.mxu0 %v560
        %824 = vmatmul.mubr.bf16.gmra.mxu0 %v559
        %v825 = vpop.f32.mrf.mxu0
        %v826 = vadd.f32 0.0, %v825
        %v827 = vpop.f32.mrf.mxu0
        %v828 = vadd.f32 0.0, %v827
        %v829 = vpop.f32.mrf.mxu0
        %v830 = vadd.f32 0.0, %v829
        %v831 = vpop.f32.mrf.mxu0
        %v832 = vadd.f32 0.0, %v831
        %833 = vmatprep.mubr.bf16.mxu0 %v562
        %834 = vmatmul.mubr.bf16.gmra.mxu0 %v561
        %v835 = vpop.f32.mrf.mxu0
        %v836 = vadd.f32 0.0, %v835
        %v837 = vpop.f32.mrf.mxu0
        %v838 = vadd.f32 0.0, %v837
        %v839 = vpop.f32.mrf.mxu0
        %v840 = vadd.f32 0.0, %v839
        %v841 = vpop.f32.mrf.mxu0
        %v842 = vadd.f32 0.0, %v841
        %843 = vmatprep.mubr.bf16.mxu0 %v564
        %844 = vmatmul.mubr.bf16.gmra.mxu0 %v563
        %v845 = vpop.f32.mrf.mxu0
        %v846 = vadd.f32 0.0, %v845
        %v847 = vpop.f32.mrf.mxu0
        %v848 = vadd.f32 0.0, %v847
        %v849 = vpop.f32.mrf.mxu0
        %v850 = vadd.f32 0.0, %v849
        %v851 = vpop.f32.mrf.mxu0
        %v852 = vadd.f32 0.0, %v851
        %853 = vmatprep.mubr.bf16.mxu0 %v566
        %854 = vmatmul.mubr.bf16.gmra.mxu0 %v565
        %v855 = vpop.f32.mrf.mxu0
        %v856 = vadd.f32 0.0, %v855
        %v857 = vpop.f32.mrf.mxu0
        %v858 = vadd.f32 0.0, %v857
        %v859 = vpop.f32.mrf.mxu0
        %v860 = vadd.f32 0.0, %v859
        %v861 = vpop.f32.mrf.mxu0
        %v862 = vadd.f32 0.0, %v861
        %863 = vmatprep.mubr.bf16.mxu0 %v568
        %864 = vmatmul.mubr.bf16.gmra.mxu0 %v567
        %v865 = vpop.f32.mrf.mxu0
        %v866 = vadd.f32 0.0, %v865
        %v867 = vpop.f32.mrf.mxu0
        %v868 = vadd.f32 0.0, %v867
        %v869 = vpop.f32.mrf.mxu0
        %v870 = vadd.f32 0.0, %v869
        %v871 = vpop.f32.mrf.mxu0
        %v872 = vadd.f32 0.0, %v871
        %873 = vdwg.mxu0
        %v874 = vmul.f32 %v796, %v796
        %v875 = vmul.f32 %v800, %v800
        %v876 = vmul.f32 %v806, %v806
        %v877 = vmul.f32 %v810, %v810
        %v878 = vmul.f32 %v816, %v816
        %v879 = vmul.f32 %v820, %v820
        %v880 = vmul.f32 %v826, %v826
        %v881 = vmul.f32 %v830, %v830
        %v882 = vmul.f32 %v836, %v836
        %v883 = vmul.f32 %v840, %v840
        %v884 = vmul.f32 %v846, %v846
        %v885 = vmul.f32 %v850, %v850
        %v886 = vmul.f32 %v856, %v856
        %v887 = vmul.f32 %v860, %v860
        %v888 = vmul.f32 %v866, %v866
        %v889 = vmul.f32 %v870, %v870
        %v890 = vmul.f32 %v798, %v798
        %v891 = vmul.f32 %v802, %v802
        %v892 = vmul.f32 %v808, %v808
        %v893 = vmul.f32 %v812, %v812
        %v894 = vmul.f32 %v818, %v818
        %v895 = vmul.f32 %v822, %v822
        %v896 = vmul.f32 %v828, %v828
        %v897 = vmul.f32 %v832, %v832
        %v898 = vmul.f32 %v838, %v838
        %v899 = vmul.f32 %v842, %v842
        %v900 = vmul.f32 %v848, %v848
        %v901 = vmul.f32 %v852, %v852
        %v902 = vmul.f32 %v858, %v858
        %v903 = vmul.f32 %v862, %v862
        %v904 = vmul.f32 %v868, %v868
        %v905 = vmul.f32 %v872, %v872
        %v906 = vadd.f32 %v874, %v890
        %v907 = vadd.f32 %v875, %v891
        %v908 = vadd.f32 %v876, %v892
        %v909 = vadd.f32 %v877, %v893
        %v910 = vadd.f32 %v878, %v894
        %v911 = vadd.f32 %v879, %v895
        %v912 = vadd.f32 %v880, %v896
        %v913 = vadd.f32 %v881, %v897
        %v914 = vadd.f32 %v882, %v898
        %v915 = vadd.f32 %v883, %v899
        %v916 = vadd.f32 %v884, %v900
        %v917 = vadd.f32 %v885, %v901
        %v918 = vadd.f32 %v886, %v902
        %v919 = vadd.f32 %v887, %v903
        %v920 = vadd.f32 %v888, %v904
        %v921 = vadd.f32 %v889, %v905
        %v922 = vmax.f32 %v906, 1e-10
        %v923 = vmax.f32 %v907, 1e-10
        %v924 = vmax.f32 %v908, 1e-10
        %v925 = vmax.f32 %v909, 1e-10
        %v926 = vmax.f32 %v910, 1e-10
        %v927 = vmax.f32 %v911, 1e-10
        %v928 = vmax.f32 %v912, 1e-10
        %v929 = vmax.f32 %v913, 1e-10
        %v930 = vmax.f32 %v914, 1e-10
        %v931 = vmax.f32 %v915, 1e-10
        %v932 = vmax.f32 %v916, 1e-10
        %v933 = vmax.f32 %v917, 1e-10
        %v934 = vmax.f32 %v918, 1e-10
        %v935 = vmax.f32 %v919, 1e-10
        %v936 = vmax.f32 %v920, 1e-10
        %v937 = vmax.f32 %v921, 1e-10
        %v938 = vrsqrt.pop %v922
        %v939 = vmul.f32 %v922, %v938
        %vm940 = vcmp.eq.f32.partialorder %v922, inf
        %v941 = vsel %vm940, %v922, %v939
        %vm942 = vcmp.eq.f32.partialorder %v922, 0.0
        %v943 = vand.u32 %v922, 2147483648
        %v944 = vsel %vm942, %v943, %v941
        %v945 = vrsqrt.pop %v923
        %v946 = vmul.f32 %v923, %v945
        %vm947 = vcmp.eq.f32.partialorder %v923, inf
        %v948 = vsel %vm947, %v923, %v946
        %vm949 = vcmp.eq.f32.partialorder %v923, 0.0
        %v950 = vand.u32 %v923, 2147483648
        %v951 = vsel %vm949, %v950, %v948
        %v952 = vrsqrt.pop %v924
        %v953 = vmul.f32 %v924, %v952
        %vm954 = vcmp.eq.f32.partialorder %v924, inf
        %v955 = vsel %vm954, %v924, %v953
        %vm956 = vcmp.eq.f32.partialorder %v924, 0.0
        %v957 = vand.u32 %v924, 2147483648
        %v958 = vsel %vm956, %v957, %v955
        %v959 = vrsqrt.pop %v925
        %v960 = vmul.f32 %v925, %v959
        %vm961 = vcmp.eq.f32.partialorder %v925, inf
        %v962 = vsel %vm961, %v925, %v960
        %vm963 = vcmp.eq.f32.partialorder %v925, 0.0
        %v964 = vand.u32 %v925, 2147483648
        %v965 = vsel %vm963, %v964, %v962
        %v966 = vrsqrt.pop %v926
        %v967 = vmul.f32 %v926, %v966
        %vm968 = vcmp.eq.f32.partialorder %v926, inf
        %v969 = vsel %vm968, %v926, %v967
        %vm970 = vcmp.eq.f32.partialorder %v926, 0.0
        %v971 = vand.u32 %v926, 2147483648
        %v972 = vsel %vm970, %v971, %v969
        %v973 = vrsqrt.pop %v927
        %v974 = vmul.f32 %v927, %v973
        %vm975 = vcmp.eq.f32.partialorder %v927, inf
        %v976 = vsel %vm975, %v927, %v974
        %vm977 = vcmp.eq.f32.partialorder %v927, 0.0
        %v978 = vand.u32 %v927, 2147483648
        %v979 = vsel %vm977, %v978, %v976
        %v980 = vrsqrt.pop %v928
        %v981 = vmul.f32 %v928, %v980
        %vm982 = vcmp.eq.f32.partialorder %v928, inf
        %v983 = vsel %vm982, %v928, %v981
        %vm984 = vcmp.eq.f32.partialorder %v928, 0.0
        %v985 = vand.u32 %v928, 2147483648
        %v986 = vsel %vm984, %v985, %v983
        %v987 = vrsqrt.pop %v929
        %v988 = vmul.f32 %v929, %v987
        %vm989 = vcmp.eq.f32.partialorder %v929, inf
        %v990 = vsel %vm989, %v929, %v988
        %vm991 = vcmp.eq.f32.partialorder %v929, 0.0
        %v992 = vand.u32 %v929, 2147483648
        %v993 = vsel %vm991, %v992, %v990
        %v994 = vrsqrt.pop %v930
        %v995 = vmul.f32 %v930, %v994
        %vm996 = vcmp.eq.f32.partialorder %v930, inf
        %v997 = vsel %vm996, %v930, %v995
        %vm998 = vcmp.eq.f32.partialorder %v930, 0.0
        %v999 = vand.u32 %v930, 2147483648
        %v1000 = vsel %vm998, %v999, %v997
        %v1001 = vrsqrt.pop %v931
        %v1002 = vmul.f32 %v931, %v1001
        %vm1003 = vcmp.eq.f32.partialorder %v931, inf
        %v1004 = vsel %vm1003, %v931, %v1002
        %vm1005 = vcmp.eq.f32.partialorder %v931, 0.0
        %v1006 = vand.u32 %v931, 2147483648
        %v1007 = vsel %vm1005, %v1006, %v1004
        %v1008 = vrsqrt.pop %v932
        %v1009 = vmul.f32 %v932, %v1008
        %vm1010 = vcmp.eq.f32.partialorder %v932, inf
        %v1011 = vsel %vm1010, %v932, %v1009
        %vm1012 = vcmp.eq.f32.partialorder %v932, 0.0
        %v1013 = vand.u32 %v932, 2147483648
        %v1014 = vsel %vm1012, %v1013, %v1011
        %v1015 = vrsqrt.pop %v933
        %v1016 = vmul.f32 %v933, %v1015
        %vm1017 = vcmp.eq.f32.partialorder %v933, inf
        %v1018 = vsel %vm1017, %v933, %v1016
        %vm1019 = vcmp.eq.f32.partialorder %v933, 0.0
        %v1020 = vand.u32 %v933, 2147483648
        %v1021 = vsel %vm1019, %v1020, %v1018
        %v1022 = vrsqrt.pop %v934
        %v1023 = vmul.f32 %v934, %v1022
        %vm1024 = vcmp.eq.f32.partialorder %v934, inf
        %v1025 = vsel %vm1024, %v934, %v1023
        %vm1026 = vcmp.eq.f32.partialorder %v934, 0.0
        %v1027 = vand.u32 %v934, 2147483648
        %v1028 = vsel %vm1026, %v1027, %v1025
        %v1029 = vrsqrt.pop %v935
        %v1030 = vmul.f32 %v935, %v1029
        %vm1031 = vcmp.eq.f32.partialorder %v935, inf
        %v1032 = vsel %vm1031, %v935, %v1030
        %vm1033 = vcmp.eq.f32.partialorder %v935, 0.0
        %v1034 = vand.u32 %v935, 2147483648
        %v1035 = vsel %vm1033, %v1034, %v1032
        %v1036 = vrsqrt.pop %v936
        %v1037 = vmul.f32 %v936, %v1036
        %vm1038 = vcmp.eq.f32.partialorder %v936, inf
        %v1039 = vsel %vm1038, %v936, %v1037
        %vm1040 = vcmp.eq.f32.partialorder %v936, 0.0
        %v1041 = vand.u32 %v936, 2147483648
        %v1042 = vsel %vm1040, %v1041, %v1039
        %v1043 = vrsqrt.pop %v937
        %v1044 = vmul.f32 %v937, %v1043
        %vm1045 = vcmp.eq.f32.partialorder %v937, inf
        %v1046 = vsel %vm1045, %v937, %v1044
        %vm1047 = vcmp.eq.f32.partialorder %v937, 0.0
        %v1048 = vand.u32 %v937, 2147483648
        %v1049 = vsel %vm1047, %v1048, %v1046
        %1050 = vxpose.xlu0.b32.start [1/16] %v944, 128
        %1051 = vxpose.xlu0.b32.cont [2/16] %v951, 128
        %1052 = vxpose.xlu0.b32.cont [3/16] %v958, 128
        %1053 = vxpose.xlu0.b32.cont [4/16] %v965, 128
        %1054 = vxpose.xlu0.b32.cont [5/16] %v972, 128
        %1055 = vxpose.xlu0.b32.cont [6/16] %v979, 128
        %1056 = vxpose.xlu0.b32.cont [7/16] %v986, 128
        %1057 = vxpose.xlu0.b32.cont [8/16] %v993, 128
        %1058 = vxpose.xlu0.b32.cont [9/16] %v1000, 128
        %1059 = vxpose.xlu0.b32.cont [10/16] %v1007, 128
        %1060 = vxpose.xlu0.b32.cont [11/16] %v1014, 128
        %1061 = vxpose.xlu0.b32.cont [12/16] %v1021, 128
        %1062 = vxpose.xlu0.b32.cont [13/16] %v1028, 128
        %1063 = vxpose.xlu0.b32.cont [14/16] %v1035, 128
        %1064 = vxpose.xlu0.b32.cont [15/16] %v1042, 128
        %1065 = vxpose.xlu0.b32.end [16/16] %v1049, 128
        %v1066 = vpop.trf.xlu0
        %v1067 = vpop.trf.xlu0
        %v1068 = vpop.trf.xlu0
        %v1069 = vpop.trf.xlu0
        %v1070 = vpop.trf.xlu0
        %v1071 = vpop.trf.xlu0
        %v1072 = vpop.trf.xlu0
        %v1073 = vpop.trf.xlu0
        %v1074 = vpop.trf.xlu0
        %v1075 = vpop.trf.xlu0
        %v1076 = vpop.trf.xlu0
        %v1077 = vpop.trf.xlu0
        %v1078 = vpop.trf.xlu0
        %v1079 = vpop.trf.xlu0
        %v1080 = vpop.trf.xlu0
        %v1081 = vpop.trf.xlu0
        %v1082 = vpack.c.bf16 %v1067, %v1066
        %v1083 = vpack.c.bf16 %v1069, %v1068
        %v1084 = vpack.c.bf16 %v1071, %v1070
        %v1085 = vpack.c.bf16 %v1073, %v1072
        %v1086 = vpack.c.bf16 %v1075, %v1074
        %v1087 = vpack.c.bf16 %v1077, %v1076
        %v1088 = vpack.c.bf16 %v1079, %v1078
        %v1089 = vpack.c.bf16 %v1081, %v1080
        %v1090 = vld [vmem:[%s3] sm:$0xf]
        %v1091 = vld [vmem:[%s3 + $0x4] sm:$0xf]
        %v1092 = vld [vmem:[%s3 + $0x8] sm:$0xf]
        %v1093 = vld [vmem:[%s3 + $0xc] sm:$0xf]
        %v1094 = vld [vmem:[%s3 + $0x10] sm:$0xf]
        %v1100 = vunpack.c.l.b16 %v1090
        %v1101 = vunpack.c.l.b16 %v1091
        %v1102 = vunpack.c.l.b16 %v1092
        %v1103 = vunpack.c.l.b16 %v1093
        %v1104 = vunpack.c.l.b16 %v1094
        %v1105 = vpack.c.b16 %v1101, %v1100
        %v1106 = vpack.c.b16 %v1103, %v1102
        %v1107 = vpack.c.b16 %v1104, %v1104
        %1111 = vmatprep.subr.bf16.mxu0 0
        %1112 = vmatpush1.bf16.msra.mxu0 %v1089
        %1113 = vmatprep.subr.bf16.mxu0 0
        %1114 = vmatpush1.bf16.msra.mxu0 %v1088
        %1115 = vmatprep.subr.bf16.mxu0 0
        %1116 = vmatpush1.bf16.msra.mxu0 %v1087
        %1117 = vmatprep.subr.bf16.mxu0 0
        %1118 = vmatpush1.bf16.msra.mxu0 %v1086
        %1119 = vmatprep.subr.bf16.mxu0 0
        %1120 = vmatpush1.bf16.msra.mxu0 %v1085
        %1121 = vmatprep.subr.bf16.mxu0 0
        %1122 = vmatpush1.bf16.msra.mxu0 %v1084
        %1123 = vmatprep.subr.bf16.mxu0 0
        %1124 = vmatpush1.bf16.msra.mxu0 %v1083
        %1125 = vmatprep.subr.bf16.mxu0 0
        %1126 = vmatpush1.bf16.msra.mxu0 %v1082
        %1127 = vmatprep.subr.bf16.mxu0 0
        %1128 = vmatpush2.bf16.msra.mxu0 0
        %1129 = vmatprep.subr.bf16.mxu0 0
        %1130 = vmatpush2.bf16.msra.mxu0 0
        %1131 = vmatprep.subr.bf16.mxu0 0
        %1132 = vmatpush2.bf16.msra.mxu0 0
        %1133 = vmatprep.subr.bf16.mxu0 0
        %1134 = vmatpush2.bf16.msra.mxu0 0
        %1135 = vmatprep.subr.bf16.mxu0 0
        %1136 = vmatpush2.bf16.msra.mxu0 0
        %1137 = vmatprep.subr.bf16.mxu0 0
        %1138 = vmatpush2.bf16.msra.mxu0 0
        %1139 = vmatprep.subr.bf16.mxu0 0
        %1140 = vmatpush2.bf16.msra.mxu0 0
        %1141 = vmatprep.subr.bf16.mxu0 0
        %1142 = vmatpush2.bf16.msra.mxu0 0
        %1143 = vmatprep.mubr.bf16.mxu0 0
        %1144 = vmatmul.mubr.bf16.gmra.mxu0 %v1105
        %v1145 = vpop.f32.mrf.mxu0
        %v1146 = vadd.f32 0.0, %v1145
        %v1147 = vpop.f32.mrf.mxu0
        %v1148 = vpop.f32.mrf.mxu0
        %v1149 = vadd.f32 0.0, %v1148
        %v1150 = vpop.f32.mrf.mxu0
        %1151 = vmatprep.mubr.bf16.mxu0 0
        %1152 = vmatmul.mubr.bf16.gmra.mxu0 %v1106
        %v1153 = vpop.f32.mrf.mxu0
        %v1154 = vadd.f32 0.0, %v1153
        %v1155 = vpop.f32.mrf.mxu0
        %v1156 = vpop.f32.mrf.mxu0
        %v1157 = vadd.f32 0.0, %v1156
        %v1158 = vpop.f32.mrf.mxu0
        %1159 = vmatprep.mubr.bf16.mxu0 0
        %1160 = vmatmul.mubr.bf16.gmra.mxu0 %v1107
        %v1161 = vpop.f32.mrf.mxu0
        %v1162 = vadd.f32 0.0, %v1161
        %v1163 = vpop.f32.mrf.mxu0
        %v1164 = vpop.f32.mrf.mxu0
        %v1165 = vpop.f32.mrf.mxu0
        %1166 = vdwg.mxu0
        %v1167 = vmax.f32 %v1146, 1e-10
        %v1168 = vmax.f32 %v1149, 1e-10
        %v1169 = vmax.f32 %v1154, 1e-10
        %v1170 = vmax.f32 %v1157, 1e-10
        %v1171 = vmax.f32 %v1162, 1e-10
        %v1172 = vlog2.pop %v1167
        %v1173 = vmul.f32 %v1172, 0.6931472
        %v1174 = vlog2.pop %v1168
        %v1175 = vmul.f32 %v1174, 0.6931472
        %v1176 = vlog2.pop %v1169
        %v1177 = vmul.f32 %v1176, 0.6931472
        %v1178 = vlog2.pop %v1170
        %v1179 = vmul.f32 %v1178, 0.6931472
        %v1180 = vlog2.pop %v1171
        %v1181 = vmul.f32 %v1180, 0.6931472
        %v1182 = vmul.f32 %v1173, 0.4342945
        %v1183 = vmul.f32 %v1175, 0.4342945
        %v1184 = vmul.f32 %v1177, 0.4342945
        %v1185 = vmul.f32 %v1179, 0.4342945
        %v1186 = vmul.f32 %v1181, 0.4342945
        %1187 = vst [vmem:[%s248] sm:$0xff] %v1182
        %1188 = vst [vmem:[%s248 + $0x8] sm:$0xff] %v1183
        %1189 = vst [vmem:[%s248 + $0x10] sm:$0xff] %v1184
        %1190 = vst [vmem:[%s248 + $0x18] sm:$0xff] %v1185
        %1191 = vst [vmem:[%s248 + $0x20] sm:$0xff] %v1186
        %s1192 = sand.u32 %s142, 1
        %s1193 = scalar_lea.sflag [#allocation3], %s1192
        %s1194 = sand.u32 %s142, 1
        %s1195 = smul.addr %s1194, 40
        %s1196 = scalar_lea.vmem [#allocation2], %s1195
        // Predicated region
        $region37: #{tpu_custom_call.1} parent=35 // pred_check
          %p1197 = pneg %p152
        $region38: #{tpu_custom_call.1} parent=35 // pred_check_branch
          %1199 = sbr.rel (%p1197) target = $region40
        $region39: #{tpu_custom_call.1} parent=35 // pred_region
          %s1201 = ssub.s32 640, 640
          %1202 = vsyncadd %s1193, %s1201
          %s1203 = smul.addr %s22, 5
          %s1204 = sadd.s32 %s23, %s1203
          %s1205 = smul.addr %s1204, 128
          %s1206 = scalar_lea.hbm %s4, %s1205
          %s1207 = sshll.u32 %s1196, 4
          %s1208 = int_to_ptr.vmem [resolvable:$true] %s1207
          %1213 = dma.vmem_to_hbm [thread:$0]  %s1208, 640, %s1206, %s1193, 128, 128, 8
        $region40: #{tpu_custom_call.1} parent=35 // pred_fallthru
          _
      $region36: #{tpu_custom_call.1} parent=5 // pred_fallthru
        _
      %p1214 = scmp.le.s32.totalorder 2, %s13
      // Predicated region
      $region41: #{tpu_custom_call.1} parent=5 // pred_check
        %p1215 = pneg %p1214
      $region42: #{tpu_custom_call.1} parent=5 // pred_check_branch
        %1217 = sbr.rel (%p1215) target = $region44
      $region43: #{tpu_custom_call.1} parent=5 // pred_region
        %s1218 = ssub.s32 %s13, 2
        // Predicated region
        $region45: #{tpu_custom_call.1} parent=43 // pred_check
          %p1219 = pneg %p158
        $region46: #{tpu_custom_call.1} parent=43 // pred_check_branch
          %1221 = sbr.rel (%p1219) target = $region48
        $region47: #{tpu_custom_call.1} parent=43 // pred_region
          %s1222 = sand.u32 %s143, 1
          %s1223 = scalar_lea.sflag [#allocation3], %s1222
          %s1224 = sand.u32 %s143, 1
          %s1225 = smul.addr %s1224, 40
          %s1226 = scalar_lea.vmem [#allocation2], %s1225
          %1227 = dma.done %s1223, 640
        $region48: #{tpu_custom_call.1} parent=43 // pred_fallthru
          _
      $region44: #{tpu_custom_call.1} parent=5 // pred_fallthru
        _
    $region6: #{tpu_custom_call.1} parent=1 // loop_footer
      %s17 = sadd.s32 1, %s13
    $region7: #{tpu_custom_call.1} parent=1 // loop_footer_branch
      %12 = sbr.rel target = $region3
    $region8: #{tpu_custom_call.1} parent=1 // loop_exit
      _
    %1228 = vsyncpa [#allocation3], 1
    %s1229 = scalar_lea.sflag [#allocation3], 1
    %1230 = vsyncpa %s1229, 1

</llo_original>
